<compile_context>
chip_gen: v5e
topology: v5e:2x2
jax: 0.10.0
libtpu: 0.0.40
codegen_flags: <defaults>
</compile_context>

<pallas_src>
import jax
import jax.numpy as jnp
from jax.experimental import pallas as pl
from jax.experimental.pallas import tpu as pltpu


def edge_expansion_kernel(x_ref, m_ref, o_ref):
    # x_ref: (tn, D)     edge-vector tile
    # m_ref: (D, H*D)    expansion matrix, M[d, h*D + d] = W[h, 0]
    # o_ref: (tn, H*D)   lane-dense flattened output tile
    x = x_ref[...].astype(jnp.float32)                           # (tn, D)
    norm = jnp.sqrt(jnp.sum(x * x, axis=1, keepdims=True))       # (tn, 1) L2 over dim=1
    xn = x * pl.reciprocal(norm + 1e-7, approx=False)            # normalized (eps on norm)
    out = jnp.dot(xn, m_ref[...].astype(jnp.float32),
                  preferred_element_type=jnp.float32)            # (tn, H*D), MXU
    o_ref[...] = out.astype(o_ref.dtype)


def _round_up(x, m):
    return ((x + m - 1) // m) * m


def edge_expansion(edge_vector, weight, *, tn=4096, out_dtype=None):
    """edge_vector: (N, D); weight: (H, 1) as in nn.Linear(1, H, bias=False).

    out_dtype: optional narrower output dtype (e.g. jnp.bfloat16) — halves the
    dominant HBM write traffic; math stays f32 inside the kernel.
    """
    N, D = edge_vector.shape
    H = weight.shape[0]
    out_dtype = edge_vector.dtype if out_dtype is None else jnp.dtype(out_dtype)

    # Sublane alignment: 8 rows for 32-bit I/O, 16 rows if any side is 16-bit.
    sub = 8
    if jnp.dtype(edge_vector.dtype).itemsize == 2 or jnp.dtype(out_dtype).itemsize == 2:
        sub = 16

    # Round (not just clamp) the requested tile, clamp to the padded problem
    # size, and keep >= 2 grid steps when possible so both v7x TCs are used.
    n_pad = _round_up(N, sub)
    tn = _round_up(max(int(tn), sub), sub)
    tn = min(tn, n_pad)
    if n_pad >= 2 * sub:
        tn = min(tn, _round_up(pl.cdiv(N, 2), sub))

    grid = (pl.cdiv(N, tn),)

    # Build M (D, H*D) with M[d, h*D + d] = W[h, 0] so that
    # (xn @ M).reshape(N, H, D)[n, h, d] == xn[n, d] * W[h, 0].
    eye = jnp.eye(D, dtype=jnp.float32)                              # (D, D)
    m = weight[:, 0].astype(jnp.float32)[:, None, None] * eye[None]  # (H, D, D)
    m = jnp.transpose(m, (1, 0, 2)).reshape(D, H * D)                # (D, H*D)

    # VMEM budget from PADDED shapes (D=3 and H*D pad to 128-lane tiles),
    # double-buffered; only override the scoped default for very large tiles.
    lane = 128
    hd_pad = _round_up(H * D, lane)
    per_step = (tn * lane * jnp.dtype(edge_vector.dtype).itemsize
                + tn * hd_pad * jnp.dtype(out_dtype).itemsize)
    m_bytes = _round_up(D, 8) * hd_pad * 4
    vmem_needed = 2 * (per_step + m_bytes) + (1 << 20)               # + headroom

    cp_kwargs = dict(dimension_semantics=("parallel",))              # shard edges across TCs
    if vmem_needed > (30 << 20):
        cp_kwargs["vmem_limit_bytes"] = int(min(vmem_needed, 100 << 20))

    out_flat = pl.pallas_call(
        edge_expansion_kernel,
        out_shape=jax.ShapeDtypeStruct((N, H * D), out_dtype),
        grid_spec=pltpu.PrefetchScalarGridSpec(
            num_scalar_prefetch=0,
            grid=grid,
            in_specs=[
                pl.BlockSpec((tn, D), lambda i: (i, 0)),        # tile over edges
                pl.BlockSpec((D, H * D), lambda i: (0, 0)),     # expansion matrix, broadcast
            ],
            out_specs=pl.BlockSpec((tn, H * D), lambda i: (i, 0)),  # lane-dense slab
        ),
        compiler_params=pltpu.CompilerParams(**cp_kwargs),
    )(edge_vector, m)

    # Free contiguous view: (N, H*D) -> (N, H, D), matching the PyTorch transpose.
    return out_flat.reshape(N, H, D)


def edge_expansion_ref(edge_vector, weight):
    x = edge_vector / (jnp.linalg.norm(edge_vector, axis=1, keepdims=True) + 1e-7)
    # (N, D, 1) * (H,) -> (N, D, H) -> transpose(1, -1) -> (N, H, D)
    exp = x[..., None] * weight[:, 0][None, None, :]
    return jnp.swapaxes(exp, 1, 2)


if __name__ == "__main__":
    N, D, H = 128, 3, 32  # 128 edges, 3-D edge vectors, edge_hidden=32
    key = jax.random.PRNGKey(0)
    k_x, k_w = jax.random.split(key)

    edge_vector = jax.random.normal(k_x, (N, D), dtype=jnp.float32)
    # nn.Linear(1, H, bias=False) weight has shape (H, 1); init ~ U(-1, 1)
    # (kaiming-uniform bound = 1/sqrt(in_features) = 1), deterministic via PRNGKey.
    weight = jax.random.uniform(k_w, (H, 1), dtype=jnp.float32, minval=-1.0, maxval=1.0)

    out = edge_expansion(edge_vector, weight)
    out = jax.block_until_ready(out)

    ref = edge_expansion_ref(edge_vector, weight)
    assert out.shape == (N, H, D), out.shape
    assert jnp.allclose(out, ref, atol=1e-5, rtol=1e-5), "mismatch vs reference"

    # Exercise the halved-write-traffic path (bf16 output, f32 math inside).
    out_bf16 = jax.block_until_ready(edge_expansion(edge_vector, weight, out_dtype=jnp.bfloat16))
    assert out_bf16.shape == (N, H, D)
    assert jnp.allclose(out_bf16.astype(jnp.float32), ref, atol=2e-2, rtol=2e-2)

    # TODO(synk): for tiny N (like this demo) prefer fusing into the surrounding
    # XLA graph / adjacent kernel — standalone launch overhead dominates.
    print("KERNEL_OK")
</pallas_src>

<mosaic_0001>
module attributes {stable_mosaic.version = 11 : i64} {
  func.func @edge_expansion_kernel(%arg0: i32, %arg1: memref<64x3xf32, #tpu.memory_space<vmem>>, %arg2: memref<3x96xf32, #tpu.memory_space<vmem>>, %arg3: memref<64x96xf32, #tpu.memory_space<vmem>>) attributes {dimension_semantics = [#tpu.dimension_semantics<parallel>], iteration_bounds = array<i64: 2>, scalar_prefetch = 0 : i64, scratch_operands = 0 : i64, tpu.core_type = #tpu.core_type<tc>, window_params = [{transform_indices = @transform_0, window_bounds = array<i64: 64, 3>}, {pipeline_mode = #tpu.pipeline_mode<synchronous>, transform_indices = @transform_1, window_bounds = array<i64: 3, 96>}, {transform_indices = @transform_2, window_bounds = array<i64: 64, 96>}]} {
    %c0 = arith.constant 0 : index
    %c0_0 = arith.constant 0 : index
    %0 = vector.load %arg1[%c0, %c0_0] : memref<64x3xf32, #tpu.memory_space<vmem>>, vector<64x3xf32>
    %1 = arith.mulf %0, %0 : vector<64x3xf32>
    %cst = arith.constant dense<0.000000e+00> : vector<64xf32>
    %2 = vector.multi_reduction <add>, %1, %cst [1] : vector<64x3xf32> to vector<64xf32>
    %3 = vector.shape_cast %2 : vector<64xf32> to vector<64x1xf32>
    %4 = math.sqrt %3 : vector<64x1xf32>
    %cst_1 = arith.constant 1.000000e-07 : f32
    %5 = vector.broadcast %cst_1 : f32 to vector<64x1xf32>
    %6 = arith.addf %4, %5 : vector<64x1xf32>
    %7 = tpu.reciprocal %6 : vector<64x1xf32> -> vector<64x1xf32>
    %8 = vector.broadcast %7 : vector<64x1xf32> to vector<64x3xf32>
    %9 = arith.mulf %0, %8 : vector<64x3xf32>
    %c0_2 = arith.constant 0 : index
    %c0_3 = arith.constant 0 : index
    %10 = vector.load %arg2[%c0_2, %c0_3] : memref<3x96xf32, #tpu.memory_space<vmem>>, vector<3x96xf32>
    %cst_4 = arith.constant dense<0.000000e+00> : vector<64x96xf32>
    %11 = tpu.matmul %9, %10, %cst_4 {dimension_numbers = #tpu.dot_dimension_numbers<[1], [0], [0], [1], [0, 0, 1, 1], [], []>} : vector<64x3xf32>, vector<3x96xf32>, vector<64x96xf32> -> vector<64x96xf32>
    %c0_5 = arith.constant 0 : index
    %c0_6 = arith.constant 0 : index
    %12 = vector.load %arg3[%c0_5, %c0_6] : memref<64x96xf32, #tpu.memory_space<vmem>>, vector<64x96xf32>
    tpu.vector_store %arg3[%c0_5, %c0_6], %11 {strides = array<i32>} : memref<64x96xf32, #tpu.memory_space<vmem>>, vector<64x96xf32>,
    return
  }
  func.func @transform_0(%arg0: i32) -> (i32, i32) {
    %c0_i32 = arith.constant 0 : i32
    %c0_i32_0 = arith.constant 0 : i32
    return %arg0, %c0_i32 : i32, i32
  }
  func.func @transform_1(%arg0: i32) -> (i32, i32) {
    %c0_i32 = arith.constant 0 : i32
    %c0_i32_0 = arith.constant 0 : i32
    %c0_i32_1 = arith.constant 0 : i32
    return %c0_i32, %c0_i32_0 : i32, i32
  }
  func.func @transform_2(%arg0: i32) -> (i32, i32) {
    %c0_i32 = arith.constant 0 : i32
    %c0_i32_0 = arith.constant 0 : i32
    return %arg0, %c0_i32 : i32, i32
  }
}

</mosaic_0001>

<llo_original>
// kernel: tpu_custom_call.1
$region0: #{tpu_custom_call.1}
  #allocation0 [shape = 'u32[]', space=smem, size = 0x4, offset = 0x4, fixed_abs, tag = 'smem constant byte address 0x4 - core index']
  #allocation1 [shape = 'u32[72,128]{1,0:T(1,128)}', space=vmem, size = 0x9000, scoped, tag = 'internal scratch']
  %s0 = inlined_call_operand.vmem [shape: f32[128,3], index: 0, kind: input, shape index: {}]
  %s1 = inlined_call_operand.vmem [shape: f32[3,96], index: 1, kind: input, shape index: {}]
  %s2 = inlined_call_operand.vmem [shape: f32[128,96], index: 2, kind: output, shape index: {}]
  %s3 = sld [smem:[#allocation0]]
  $region41: #{tpu_custom_call.1} parent=0
    _
  %s5 = ssub.s32 1, %s3
  %s6 = scalar_select 0, %s5, %s3
  loop: start=0, step=1, limit=4
  $region2: #{tpu_custom_call.1} parent=0 // loop_pre_header
    _
  $region3: #{tpu_custom_call.1} parent=0 // loop_header
    %s8 = sphi 0, %s12
    %p9 = scmp.ge.s32.totalorder %s8, 4
    %s18 = sphi 0, %s20
    %s21 = sphi 0, %s18
    %s22 = sphi 0, %s21
    %s38 = sphi 0, %s22
    %s42 = sphi 0, %s42
    %s44 = sphi 0, %s42
    %s45 = sphi 0, %s44
    %s59 = sphi 0, %s45
    %s65 = sphi 0, %s67
    %s68 = sphi 0, %s65
    %s69 = sphi 0, %s68
    %s85 = sphi 0, %s69
  $region4: #{tpu_custom_call.1} parent=0 // loop_header_branch
    %11 = sbr.rel (%p9) target = $region8
  $region5: #{tpu_custom_call.1} parent=0 // loop_body
    %s13 = ssub.s32 %s8, 1
    %s14 = ssub.s32 %s8, 2
    %s15 = sadd.s32 %s8, 1
    %s16 = ssub.s32 %s8, %s15
    %p17 = scmp.eq.s32.totalorder %s16, 0
    %s19 = sadd.s32 %s18, 1
    %s20 = scalar_select %p17, %s18, %s19
    %p23 = pneg %p17
    %p24 = scmp.eq.s32.totalorder %s8, 1
    %p25 = por %p23, %p24
    %p26 = scmp.ne.s32.totalorder %s18, %s21
    %p27 = scmp.eq.s32.totalorder %s8, 0
    %p28 = por %p26, %p27
    %p29 = scmp.ne.s32.totalorder %s18, %s21
    %p30 = scmp.eq.s32.totalorder %s13, 1
    %p31 = por %p29, %p30
    %p32 = scmp.ne.s32.totalorder %s21, %s22
    %p33 = scmp.eq.s32.totalorder %s13, 0
    %p34 = por %p32, %p33
    %p35 = scmp.ne.s32.totalorder %s21, %s22
    %p36 = scmp.eq.s32.totalorder %s14, 1
    %p37 = por %p35, %p36
    %p39 = scmp.ne.s32.totalorder %s22, %s38
    %p40 = scmp.eq.s32.totalorder %s14, 0
    %p41 = por %p39, %p40
    %s43 = sadd.s32 %s42, 1
    %p46 = scmp.eq.s32.totalorder %s8, 1
    %p47 = scmp.ne.s32.totalorder %s42, %s44
    %p48 = scmp.eq.s32.totalorder %s8, 0
    %p49 = por %p47, %p48
    %p50 = scmp.ne.s32.totalorder %s42, %s44
    %p51 = scmp.eq.s32.totalorder %s13, 1
    %p52 = por %p50, %p51
    %p53 = scmp.ne.s32.totalorder %s44, %s45
    %p54 = scmp.eq.s32.totalorder %s13, 0
    %p55 = por %p53, %p54
    %p56 = scmp.ne.s32.totalorder %s44, %s45
    %p57 = scmp.eq.s32.totalorder %s14, 1
    %p58 = por %p56, %p57
    %p60 = scmp.ne.s32.totalorder %s45, %s59
    %p61 = scmp.eq.s32.totalorder %s14, 0
    %p62 = por %p60, %p61
    %s63 = ssub.s32 %s8, %s15
    %p64 = scmp.eq.s32.totalorder %s63, 0
    %s66 = sadd.s32 %s65, 1
    %s67 = scalar_select %p64, %s65, %s66
    %p70 = pneg %p64
    %p71 = scmp.eq.s32.totalorder %s8, 1
    %p72 = por %p70, %p71
    %p73 = scmp.ne.s32.totalorder %s65, %s68
    %p74 = scmp.eq.s32.totalorder %s8, 0
    %p75 = por %p73, %p74
    %p76 = scmp.ne.s32.totalorder %s65, %s68
    %p77 = scmp.eq.s32.totalorder %s13, 1
    %p78 = por %p76, %p77
    %p79 = scmp.ne.s32.totalorder %s68, %s69
    %p80 = scmp.eq.s32.totalorder %s13, 0
    %p81 = por %p79, %p80
    %p82 = scmp.ne.s32.totalorder %s68, %s69
    %p83 = scmp.eq.s32.totalorder %s14, 1
    %p84 = por %p82, %p83
    %p86 = scmp.ne.s32.totalorder %s69, %s85
    %p87 = scmp.eq.s32.totalorder %s14, 0
    %p88 = por %p86, %p87
    %p89 = scmp.le.s32.totalorder 1, %s8
    %p90 = scmp.lt.s32.totalorder %s8, 3
    %p91 = pnand %p89, %p90
    %p92 = pneg %p91
    // Predicated region
    $region9: #{tpu_custom_call.1} parent=5 // pred_check
      _
    $region10: #{tpu_custom_call.1} parent=5 // pred_check_branch
      %94 = sbr.rel (%p91) target = $region12
    $region11: #{tpu_custom_call.1} parent=5 // pred_region
      %s95 = ssub.s32 %s8, 1
      // Predicated region
      $region13: #{tpu_custom_call.1} parent=11 // pred_check
        %p96 = pneg %p55
      $region14: #{tpu_custom_call.1} parent=11 // pred_check_branch
        %98 = sbr.rel (%p96) target = $region16
      $region15: #{tpu_custom_call.1} parent=11 // pred_region
        _
      $region16: #{tpu_custom_call.1} parent=11 // pred_fallthru
        _
    $region12: #{tpu_custom_call.1} parent=5 // pred_fallthru
      _
    %p99 = scmp.lt.s32.totalorder %s8, 2
    // Predicated region
    $region17: #{tpu_custom_call.1} parent=5 // pred_check
      %p100 = pneg %p99
    $region18: #{tpu_custom_call.1} parent=5 // pred_check_branch
      %102 = sbr.rel (%p100) target = $region20
    $region19: #{tpu_custom_call.1} parent=5 // pred_region
      // Predicated region
      $region21: #{tpu_custom_call.1} parent=19 // pred_check
        %p103 = pneg %p28
      $region22: #{tpu_custom_call.1} parent=19 // pred_check_branch
        %105 = sbr.rel (%p103) target = $region24
      $region23: #{tpu_custom_call.1} parent=19 // pred_region
        %s106 = smul.u32 8, %s8
        %p107 = scmp.lt.s32.totalorder %s106, 15
        %s108 = scalar_select %p107, %s106, 15
        %s109 = smul.addr %s108, 8
        %s110 = scalar_lea.vmem %s0, %s109
        %s111 = smul.u32 8, %s8
      $region24: #{tpu_custom_call.1} parent=19 // pred_fallthru
        _
    $region20: #{tpu_custom_call.1} parent=5 // pred_fallthru
      _
    %p112 = scmp.le.s32.totalorder 1, %s8
    %p113 = scmp.lt.s32.totalorder %s8, 3
    %p114 = pnand %p112, %p113
    %p115 = pneg %p114
    // Predicated region
    $region25: #{tpu_custom_call.1} parent=5 // pred_check
      _
    $region26: #{tpu_custom_call.1} parent=5 // pred_check_branch
      %117 = sbr.rel (%p114) target = $region28
    $region27: #{tpu_custom_call.1} parent=5 // pred_region
      %s118 = ssub.s32 %s8, 1
      %s119 = smul.u32 8, %s13
      %p120 = scmp.lt.s32.totalorder %s119, 15
      %s121 = scalar_select %p120, %s119, 15
      %s122 = smul.addr %s121, 8
      %s123 = scalar_lea.vmem %s0, %s122
      %p124 = pneg %p34
      %p125 = pneg %p31
      %p126 = pneg %p55
      %p127 = pneg %p52
      %p128 = pneg %p81
      %p129 = pneg %p78
      %s130 = smul.u32 8, %s13
      %p131 = scmp.lt.s32.totalorder %s130, 15
      %s132 = scalar_select %p131, %s130, 15
      %s133 = smul.addr %s132, 8
      %s134 = scalar_lea.vmem %s2, %s133
      %s135 = smul.u32 8, %s13
      %p136 = scmp.lt.s32.totalorder %s135, 15
      %s137 = scalar_select %p136, %s135, 15
      %s138 = smul.addr %s137, 8
      %s139 = scalar_lea.vmem %s0, %s138
      %s140 = smul.u32 8, %s13
      %s141 = smul.u32 8, %s13
      %p142 = scmp.lt.s32.totalorder %s141, 15
      %s143 = scalar_select %p142, %s141, 15
      %s144 = smul.addr %s143, 8
      %s145 = scalar_lea.vmem %s2, %s144
      %s146 = smul.u32 8, %s13
      %v147 = vld [vmem:[%s139] sm:$0xff]
      %v148 = vld [vmem:[%s139 + $0x8] sm:$0xff]
      %v149 = vld [vmem:[%s139 + $0x10] sm:$0xff]
      %v150 = vld [vmem:[%s139 + $0x18] sm:$0xff]
      %v151 = vld [vmem:[%s139 + $0x20] sm:$0xff]
      %v152 = vld [vmem:[%s139 + $0x28] sm:$0xff]
      %v153 = vld [vmem:[%s139 + $0x30] sm:$0xff]
      %v154 = vld [vmem:[%s139 + $0x38] sm:$0xff]
      %v155 = vmul.f32 %v147, %v147
      %v156 = vmul.f32 %v148, %v148
      %v157 = vmul.f32 %v149, %v149
      %v158 = vmul.f32 %v150, %v150
      %v159 = vmul.f32 %v151, %v151
      %v160 = vmul.f32 %v152, %v152
      %v161 = vmul.f32 %v153, %v153
      %v162 = vmul.f32 %v154, %v154
      %vm163 = vcmask 23552
      %v164 = vsel %vm163, %v155, 0.0
      %165 = vadd.xlane.f32.xlu0 %v164
      %v166 = vpop.xlane.xlu0 %165
      %v167 = vsel %vm163, %v156, 0.0
      %168 = vadd.xlane.f32.xlu0 %v167
      %v169 = vpop.xlane.xlu0 %168
      %v170 = vsel %vm163, %v157, 0.0
      %171 = vadd.xlane.f32.xlu0 %v170
      %v172 = vpop.xlane.xlu0 %171
      %v173 = vsel %vm163, %v158, 0.0
      %174 = vadd.xlane.f32.xlu0 %v173
      %v175 = vpop.xlane.xlu0 %174
      %v176 = vsel %vm163, %v159, 0.0
      %177 = vadd.xlane.f32.xlu0 %v176
      %v178 = vpop.xlane.xlu0 %177
      %v179 = vsel %vm163, %v160, 0.0
      %180 = vadd.xlane.f32.xlu0 %v179
      %v181 = vpop.xlane.xlu0 %180
      %v182 = vsel %vm163, %v161, 0.0
      %183 = vadd.xlane.f32.xlu0 %v182
      %v184 = vpop.xlane.xlu0 %183
      %v185 = vsel %vm163, %v162, 0.0
      %186 = vadd.xlane.f32.xlu0 %v185
      %v187 = vpop.xlane.xlu0 %186
      %v188 = vrsqrt.pop %v166
      %v189 = vmul.f32 %v188, %v166
      %v190 = vmul.f32 %v189, %v188
      %v191 = vmul.f32 0.5, %v190
      %v192 = vsub.f32 1.5, %v191
      %v193 = vmul.f32 %v188, %v192
      %v194 = vmul.f32 %v166, %v193
      %vm195 = vcmp.eq.f32.partialorder %v166, inf
      %v196 = vsel %vm195, %v166, %v194
      %vm197 = vcmp.eq.f32.partialorder %v166, 0.0
      %v198 = vand.u32 %v166, 2147483648
      %v199 = vsel %vm197, %v198, %v196
      %v200 = vrsqrt.pop %v169
      %v201 = vmul.f32 %v200, %v169
      %v202 = vmul.f32 %v201, %v200
      %v203 = vmul.f32 0.5, %v202
      %v204 = vsub.f32 1.5, %v203
      %v205 = vmul.f32 %v200, %v204
      %v206 = vmul.f32 %v169, %v205
      %vm207 = vcmp.eq.f32.partialorder %v169, inf
      %v208 = vsel %vm207, %v169, %v206
      %vm209 = vcmp.eq.f32.partialorder %v169, 0.0
      %v210 = vand.u32 %v169, 2147483648
      %v211 = vsel %vm209, %v210, %v208
      %v212 = vrsqrt.pop %v172
      %v213 = vmul.f32 %v212, %v172
      %v214 = vmul.f32 %v213, %v212
      %v215 = vmul.f32 0.5, %v214
      %v216 = vsub.f32 1.5, %v215
      %v217 = vmul.f32 %v212, %v216
      %v218 = vmul.f32 %v172, %v217
      %vm219 = vcmp.eq.f32.partialorder %v172, inf
      %v220 = vsel %vm219, %v172, %v218
      %vm221 = vcmp.eq.f32.partialorder %v172, 0.0
      %v222 = vand.u32 %v172, 2147483648
      %v223 = vsel %vm221, %v222, %v220
      %v224 = vrsqrt.pop %v175
      %v225 = vmul.f32 %v224, %v175
      %v226 = vmul.f32 %v225, %v224
      %v227 = vmul.f32 0.5, %v226
      %v228 = vsub.f32 1.5, %v227
      %v229 = vmul.f32 %v224, %v228
      %v230 = vmul.f32 %v175, %v229
      %vm231 = vcmp.eq.f32.partialorder %v175, inf
      %v232 = vsel %vm231, %v175, %v230
      %vm233 = vcmp.eq.f32.partialorder %v175, 0.0
      %v234 = vand.u32 %v175, 2147483648
      %v235 = vsel %vm233, %v234, %v232
      %v236 = vrsqrt.pop %v178
      %v237 = vmul.f32 %v236, %v178
      %v238 = vmul.f32 %v237, %v236
      %v239 = vmul.f32 0.5, %v238
      %v240 = vsub.f32 1.5, %v239
      %v241 = vmul.f32 %v236, %v240
      %v242 = vmul.f32 %v178, %v241
      %vm243 = vcmp.eq.f32.partialorder %v178, inf
      %v244 = vsel %vm243, %v178, %v242
      %vm245 = vcmp.eq.f32.partialorder %v178, 0.0
      %v246 = vand.u32 %v178, 2147483648
      %v247 = vsel %vm245, %v246, %v244
      %v248 = vrsqrt.pop %v181
      %v249 = vmul.f32 %v248, %v181
      %v250 = vmul.f32 %v249, %v248
      %v251 = vmul.f32 0.5, %v250
      %v252 = vsub.f32 1.5, %v251
      %v253 = vmul.f32 %v248, %v252
      %v254 = vmul.f32 %v181, %v253
      %vm255 = vcmp.eq.f32.partialorder %v181, inf
      %v256 = vsel %vm255, %v181, %v254
      %vm257 = vcmp.eq.f32.partialorder %v181, 0.0
      %v258 = vand.u32 %v181, 2147483648
      %v259 = vsel %vm257, %v258, %v256
      %v260 = vrsqrt.pop %v184
      %v261 = vmul.f32 %v260, %v184
      %v262 = vmul.f32 %v261, %v260
      %v263 = vmul.f32 0.5, %v262
      %v264 = vsub.f32 1.5, %v263
      %v265 = vmul.f32 %v260, %v264
      %v266 = vmul.f32 %v184, %v265
      %vm267 = vcmp.eq.f32.partialorder %v184, inf
      %v268 = vsel %vm267, %v184, %v266
      %vm269 = vcmp.eq.f32.partialorder %v184, 0.0
      %v270 = vand.u32 %v184, 2147483648
      %v271 = vsel %vm269, %v270, %v268
      %v272 = vrsqrt.pop %v187
      %v273 = vmul.f32 %v272, %v187
      %v274 = vmul.f32 %v273, %v272
      %v275 = vmul.f32 0.5, %v274
      %v276 = vsub.f32 1.5, %v275
      %v277 = vmul.f32 %v272, %v276
      %v278 = vmul.f32 %v187, %v277
      %vm279 = vcmp.eq.f32.partialorder %v187, inf
      %v280 = vsel %vm279, %v187, %v278
      %vm281 = vcmp.eq.f32.partialorder %v187, 0.0
      %v282 = vand.u32 %v187, 2147483648
      %v283 = vsel %vm281, %v282, %v280
      %v284 = vadd.f32 %v199, 1e-07
      %v285 = vadd.f32 %v211, 1e-07
      %v286 = vadd.f32 %v223, 1e-07
      %v287 = vadd.f32 %v235, 1e-07
      %v288 = vadd.f32 %v247, 1e-07
      %v289 = vadd.f32 %v259, 1e-07
      %v290 = vadd.f32 %v271, 1e-07
      %v291 = vadd.f32 %v283, 1e-07
      %v292 = vrcp.pop %v284
      %v293 = vmul.f32 %v284, %v292
      %v294 = vsub.f32 1.0, %v293
      %v295 = vmul.f32 %v292, %v294
      %v296 = vadd.f32 %v292, %v295
      %vm297 = vweird.f32 %v284
      %vm298 = vweird.f32 %v292
      %vm299 = vmor %vm297, %vm298
      %v300 = vsel %vm299, %v292, %v296
      %v301 = vand.u32 2147483647, %v284
      %vm302 = vcmp.eq.f32.partialorder %v301, 8.507059e+37
      %v303 = vand.u32 %v284, 2147483648
      %v304 = vor.u32 1.1754944e-38, %v303
      %v305 = vsel %vm302, %v304, %v300
      %v306 = vrcp.pop %v285
      %v307 = vmul.f32 %v285, %v306
      %v308 = vsub.f32 1.0, %v307
      %v309 = vmul.f32 %v306, %v308
      %v310 = vadd.f32 %v306, %v309
      %vm311 = vweird.f32 %v285
      %vm312 = vweird.f32 %v306
      %vm313 = vmor %vm311, %vm312
      %v314 = vsel %vm313, %v306, %v310
      %v315 = vand.u32 2147483647, %v285
      %vm316 = vcmp.eq.f32.partialorder %v315, 8.507059e+37
      %v317 = vand.u32 %v285, 2147483648
      %v318 = vor.u32 1.1754944e-38, %v317
      %v319 = vsel %vm316, %v318, %v314
      %v320 = vrcp.pop %v286
      %v321 = vmul.f32 %v286, %v320
      %v322 = vsub.f32 1.0, %v321
      %v323 = vmul.f32 %v320, %v322
      %v324 = vadd.f32 %v320, %v323
      %vm325 = vweird.f32 %v286
      %vm326 = vweird.f32 %v320
      %vm327 = vmor %vm325, %vm326
      %v328 = vsel %vm327, %v320, %v324
      %v329 = vand.u32 2147483647, %v286
      %vm330 = vcmp.eq.f32.partialorder %v329, 8.507059e+37
      %v331 = vand.u32 %v286, 2147483648
      %v332 = vor.u32 1.1754944e-38, %v331
      %v333 = vsel %vm330, %v332, %v328
      %v334 = vrcp.pop %v287
      %v335 = vmul.f32 %v287, %v334
      %v336 = vsub.f32 1.0, %v335
      %v337 = vmul.f32 %v334, %v336
      %v338 = vadd.f32 %v334, %v337
      %vm339 = vweird.f32 %v287
      %vm340 = vweird.f32 %v334
      %vm341 = vmor %vm339, %vm340
      %v342 = vsel %vm341, %v334, %v338
      %v343 = vand.u32 2147483647, %v287
      %vm344 = vcmp.eq.f32.partialorder %v343, 8.507059e+37
      %v345 = vand.u32 %v287, 2147483648
      %v346 = vor.u32 1.1754944e-38, %v345
      %v347 = vsel %vm344, %v346, %v342
      %v348 = vrcp.pop %v288
      %v349 = vmul.f32 %v288, %v348
      %v350 = vsub.f32 1.0, %v349
      %v351 = vmul.f32 %v348, %v350
      %v352 = vadd.f32 %v348, %v351
      %vm353 = vweird.f32 %v288
      %vm354 = vweird.f32 %v348
      %vm355 = vmor %vm353, %vm354
      %v356 = vsel %vm355, %v348, %v352
      %v357 = vand.u32 2147483647, %v288
      %vm358 = vcmp.eq.f32.partialorder %v357, 8.507059e+37
      %v359 = vand.u32 %v288, 2147483648
      %v360 = vor.u32 1.1754944e-38, %v359
      %v361 = vsel %vm358, %v360, %v356
      %v362 = vrcp.pop %v289
      %v363 = vmul.f32 %v289, %v362
      %v364 = vsub.f32 1.0, %v363
      %v365 = vmul.f32 %v362, %v364
      %v366 = vadd.f32 %v362, %v365
      %vm367 = vweird.f32 %v289
      %vm368 = vweird.f32 %v362
      %vm369 = vmor %vm367, %vm368
      %v370 = vsel %vm369, %v362, %v366
      %v371 = vand.u32 2147483647, %v289
      %vm372 = vcmp.eq.f32.partialorder %v371, 8.507059e+37
      %v373 = vand.u32 %v289, 2147483648
      %v374 = vor.u32 1.1754944e-38, %v373
      %v375 = vsel %vm372, %v374, %v370
      %v376 = vrcp.pop %v290
      %v377 = vmul.f32 %v290, %v376
      %v378 = vsub.f32 1.0, %v377
      %v379 = vmul.f32 %v376, %v378
      %v380 = vadd.f32 %v376, %v379
      %vm381 = vweird.f32 %v290
      %vm382 = vweird.f32 %v376
      %vm383 = vmor %vm381, %vm382
      %v384 = vsel %vm383, %v376, %v380
      %v385 = vand.u32 2147483647, %v290
      %vm386 = vcmp.eq.f32.partialorder %v385, 8.507059e+37
      %v387 = vand.u32 %v290, 2147483648
      %v388 = vor.u32 1.1754944e-38, %v387
      %v389 = vsel %vm386, %v388, %v384
      %v390 = vrcp.pop %v291
      %v391 = vmul.f32 %v291, %v390
      %v392 = vsub.f32 1.0, %v391
      %v393 = vmul.f32 %v390, %v392
      %v394 = vadd.f32 %v390, %v393
      %vm395 = vweird.f32 %v291
      %vm396 = vweird.f32 %v390
      %vm397 = vmor %vm395, %vm396
      %v398 = vsel %vm397, %v390, %v394
      %v399 = vand.u32 2147483647, %v291
      %vm400 = vcmp.eq.f32.partialorder %v399, 8.507059e+37
      %v401 = vand.u32 %v291, 2147483648
      %v402 = vor.u32 1.1754944e-38, %v401
      %v403 = vsel %vm400, %v402, %v398
      %v404 = vmul.f32 %v147, %v305
      %v405 = vmul.f32 %v148, %v319
      %v406 = vmul.f32 %v149, %v333
      %v407 = vmul.f32 %v150, %v347
      %v408 = vmul.f32 %v151, %v361
      %v409 = vmul.f32 %v152, %v375
      %v410 = vmul.f32 %v153, %v389
      %v411 = vmul.f32 %v154, %v403
      %v412 = vld [vmem:[%s1] sm:$0x7]
      %v414 = vsel %vm163, %v404, 0
      %v417 = vsel %vm163, %v405, 0
      %v420 = vsel %vm163, %v406, 0
      %v423 = vsel %vm163, %v407, 0
      %v426 = vsel %vm163, %v408, 0
      %v429 = vsel %vm163, %v409, 0
      %v432 = vsel %vm163, %v410, 0
      %v435 = vsel %vm163, %v411, 0
      %vm437 = vcmask 1042432
      %v439 = vsel %vm437, %v412, 0
      %441 = vmatpush.msra.mxu0 0.0
      %442 = vmatpush.msra.mxu0 0.0
      %443 = vmatpush.msra.mxu0 0.0
      %444 = vmatpush.msra.mxu0 0.0
      %445 = vmatpush.msra.mxu0 0.0
      %446 = vmatpush.msra.mxu0 0.0
      %447 = vmatpush.msra.mxu0 0.0
      %448 = vmatpush.msra.mxu0 0.0
      %449 = vmatpush.msra.mxu0 0.0
      %450 = vmatpush.msra.mxu0 0.0
      %451 = vmatpush.msra.mxu0 0.0
      %452 = vmatpush.msra.mxu0 0.0
      %453 = vmatpush.msra.mxu0 0.0
      %454 = vmatpush.msra.mxu0 0.0
      %455 = vmatpush.msra.mxu0 0.0
      %456 = vmatpush.msra.mxu0 %v439
      %457 = vmatmul.f32.gmra.mxu0 %v414
      %v458 = vpop.f32.mrf.mxu0
      %v459 = vadd.f32 0.0, %v458
      %460 = vmatmul.f32.gmra.mxu0 %v417
      %v461 = vpop.f32.mrf.mxu0
      %v462 = vadd.f32 0.0, %v461
      %463 = vmatmul.f32.gmra.mxu0 %v420
      %v464 = vpop.f32.mrf.mxu0
      %v465 = vadd.f32 0.0, %v464
      %466 = vmatmul.f32.gmra.mxu0 %v423
      %v467 = vpop.f32.mrf.mxu0
      %v468 = vadd.f32 0.0, %v467
      %469 = vmatmul.f32.gmra.mxu0 %v426
      %v470 = vpop.f32.mrf.mxu0
      %v471 = vadd.f32 0.0, %v470
      %472 = vmatmul.f32.gmra.mxu0 %v429
      %v473 = vpop.f32.mrf.mxu0
      %v474 = vadd.f32 0.0, %v473
      %475 = vmatmul.f32.gmra.mxu0 %v432
      %v476 = vpop.f32.mrf.mxu0
      %v477 = vadd.f32 0.0, %v476
      %478 = vmatmul.f32.gmra.mxu0 %v435
      %v479 = vpop.f32.mrf.mxu0
      %v480 = vadd.f32 0.0, %v479
      %481 = vdwg.mxu0
      %vm482 = vcmask 785408
      %483 = vst.msk [vmem:[%s145] sm:$0xff] %vm482, %v459
      %484 = vst.msk [vmem:[%s145 + $0x8] sm:$0xff] %vm482, %v462
      %485 = vst.msk [vmem:[%s145 + $0x10] sm:$0xff] %vm482, %v465
      %486 = vst.msk [vmem:[%s145 + $0x18] sm:$0xff] %vm482, %v468
      %487 = vst.msk [vmem:[%s145 + $0x20] sm:$0xff] %vm482, %v471
      %488 = vst.msk [vmem:[%s145 + $0x28] sm:$0xff] %vm482, %v474
      %489 = vst.msk [vmem:[%s145 + $0x30] sm:$0xff] %vm482, %v477
      %490 = vst.msk [vmem:[%s145 + $0x38] sm:$0xff] %vm482, %v480
      %s491 = smul.u32 8, %s13
      %p492 = scmp.lt.s32.totalorder %s491, 15
      %s493 = scalar_select %p492, %s491, 15
      %s494 = smul.addr %s493, 8
      %s495 = scalar_lea.vmem %s2, %s494
      // Predicated region
      $region29: #{tpu_custom_call.1} parent=27 // pred_check
        %p496 = pneg %p78
      $region30: #{tpu_custom_call.1} parent=27 // pred_check_branch
        %498 = sbr.rel (%p496) target = $region32
      $region31: #{tpu_custom_call.1} parent=27 // pred_region
        %s499 = smul.u32 8, %s13
      $region32: #{tpu_custom_call.1} parent=27 // pred_fallthru
        _
    $region28: #{tpu_custom_call.1} parent=5 // pred_fallthru
      _
    %p500 = scmp.le.s32.totalorder 2, %s8
    // Predicated region
    $region33: #{tpu_custom_call.1} parent=5 // pred_check
      %p501 = pneg %p500
    $region34: #{tpu_custom_call.1} parent=5 // pred_check_branch
      %503 = sbr.rel (%p501) target = $region36
    $region35: #{tpu_custom_call.1} parent=5 // pred_region
      %s504 = ssub.s32 %s8, 2
      // Predicated region
      $region37: #{tpu_custom_call.1} parent=35 // pred_check
        %p505 = pneg %p84
      $region38: #{tpu_custom_call.1} parent=35 // pred_check_branch
        %507 = sbr.rel (%p505) target = $region40
      $region39: #{tpu_custom_call.1} parent=35 // pred_region
        %s508 = smul.u32 8, %s14
        %p509 = scmp.lt.s32.totalorder %s508, 15
        %s510 = scalar_select %p509, %s508, 15
        %s511 = smul.addr %s510, 8
        %s512 = scalar_lea.vmem %s2, %s511
      $region40: #{tpu_custom_call.1} parent=35 // pred_fallthru
        _
    $region36: #{tpu_custom_call.1} parent=5 // pred_fallthru
      _
  $region6: #{tpu_custom_call.1} parent=0 // loop_footer
    %s12 = sadd.s32 1, %s8
  $region7: #{tpu_custom_call.1} parent=0 // loop_footer_branch
    %7 = sbr.rel target = $region3
  $region8: #{tpu_custom_call.1} parent=0 // loop_exit
    _

</llo_original>
